<compile_context>
chip_gen: v7x
topology: tpu7x:2x2x1
jax: 0.10.0
libtpu: 0.0.40
codegen_flags: <defaults>
</compile_context>

<pallas_src>
import functools

import jax
import jax.numpy as jnp
from jax.experimental import pallas as pl
from jax.experimental.pallas import tpu as pltpu

INPUT_SIZE = 11
HIDDEN_SIZE = 64
OUTPUT_SIZE = 3

DEFAULT_BATCH_TILE = 32768  # upper bound; generation-aware cap applied below


def _round_up(n, m):
    return (n + m - 1) // m * m


def _tpu_limits():
    """(max batch tile in lanes, scoped vmem limit bytes), generation-aware.

    v7x has 64 MiB physical VMEM -> cap the tile at 16384 lanes under a 32 MiB
    scoped limit; 128 MiB parts (v5e/v6e) can go to 32768 lanes / 64 MiB.
    Falls back to the v7x-safe numbers if the query is unavailable.
    """
    try:
        info = pltpu.get_tpu_info()
        vmem = int(getattr(info, "vmem_capacity_bytes", 64 * 1024 * 1024))
    except Exception:  # pragma: no cover - conservative fallback
        vmem = 64 * 1024 * 1024
    if vmem >= 100 * 1024 * 1024:
        return 32768, 64 * 1024 * 1024
    return 16384, 32 * 1024 * 1024


_MAX_BATCH_TILE, _VMEM_LIMIT_BYTES = _tpu_limits()


def _choose_tile(batch, block_b):
    """Pick (tile_lanes, padded_batch, grid_steps) for a given batch size."""
    cap = max(128, min(block_b, _MAX_BATCH_TILE) // 128 * 128)
    lanes = _round_up(batch, 128)
    n = max(1, -(-lanes // cap))
    if n == 1 and lanes >= 256:
        n = 2  # give v7x's second TensorCore work; harmless on 1-TC chips
    tb = _round_up(-(-lanes // n), 128)
    return tb, n * tb, n


def _mlp_kernel(x_ref, w1_ref, b1_ref, w2_ref, b2_ref, w3_ref, b3_ref, o_ref):
    # x_ref : [INPUT_SIZE, TB]  bf16   (batch on the lane axis)
    # wN_ref: PyTorch layout [out, in], bf16
    # bN_ref: [out, 1] f32 (broadcast along lanes)
    x = x_ref[...]

    h1 = jnp.dot(w1_ref[...], x, preferred_element_type=jnp.float32) + b1_ref[...]
    h1 = jnp.maximum(h1, 0.0).astype(jnp.bfloat16)  # ReLU in f32, bf16 into next MXU pass

    h2 = jnp.dot(w2_ref[...], h1, preferred_element_type=jnp.float32) + b2_ref[...]
    h2 = jnp.maximum(h2, 0.0).astype(jnp.bfloat16)

    o_ref[...] = jnp.dot(w3_ref[...], h2, preferred_element_type=jnp.float32) + b3_ref[...]


def _pallas_mlp(x_fm, params, tb):
    """x_fm: [INPUT_SIZE, b_pad] bf16 with b_pad % tb == 0 -> [OUTPUT_SIZE, b_pad] f32."""
    w1, b1, w2, b2, w3, b3 = params
    b_pad = x_fm.shape[1]
    grid = (b_pad // tb,)

    # Weights/biases: constant block index -> stay resident in VMEM across steps.
    const = lambda shape: pl.BlockSpec(shape, lambda i: (0, 0))

    flops = 2 * b_pad * (INPUT_SIZE * HIDDEN_SIZE
                         + HIDDEN_SIZE * HIDDEN_SIZE
                         + HIDDEN_SIZE * OUTPUT_SIZE)
    param_bytes = (2 * (INPUT_SIZE * HIDDEN_SIZE + HIDDEN_SIZE * HIDDEN_SIZE
                        + HIDDEN_SIZE * OUTPUT_SIZE)
                   + 4 * (2 * HIDDEN_SIZE + OUTPUT_SIZE))
    bytes_accessed = b_pad * (INPUT_SIZE * 2 + OUTPUT_SIZE * 4) + param_bytes

    return pl.pallas_call(
        _mlp_kernel,
        out_shape=jax.ShapeDtypeStruct((OUTPUT_SIZE, b_pad), jnp.float32),
        grid=grid,
        in_specs=[
            pl.BlockSpec((INPUT_SIZE, tb), lambda i: (0, i)),   # x tile marches over batch
            const((HIDDEN_SIZE, INPUT_SIZE)),
            const((HIDDEN_SIZE, 1)),
            const((HIDDEN_SIZE, HIDDEN_SIZE)),
            const((HIDDEN_SIZE, 1)),
            const((OUTPUT_SIZE, HIDDEN_SIZE)),
            const((OUTPUT_SIZE, 1)),
        ],
        out_specs=pl.BlockSpec((OUTPUT_SIZE, tb), lambda i: (0, i)),
        compiler_params=pltpu.CompilerParams(
            dimension_semantics=("parallel",),        # shard batch steps across 2 TCs on v7x
            vmem_limit_bytes=_VMEM_LIMIT_BYTES,
        ),
        cost_estimate=pl.CostEstimate(
            flops=flops, transcendentals=0, bytes_accessed=bytes_accessed),
    )(x_fm, w1, b1, w2, b2, w3, b3)


@functools.partial(jax.jit, static_argnames=("block_b",))
def deep_q_net_forward_fm(x_fm, params, *, block_b=DEFAULT_BATCH_TILE):
    """Fast path: feature-major bf16 input [INPUT_SIZE, B] -> [OUTPUT_SIZE, B] f32.

    No transpose/cast HBM passes; production callers should keep activations in
    this layout end-to-end.
    """
    B = x_fm.shape[1]
    tb, b_pad, _ = _choose_tile(B, block_b)
    if b_pad != B:
        x_fm = jnp.pad(x_fm, ((0, 0), (0, b_pad - B)))
    out = _pallas_mlp(x_fm.astype(jnp.bfloat16), params, tb)
    return out[:, :B]


@functools.partial(jax.jit, static_argnames=("block_b",))
def deep_q_net_forward(x, params, *, block_b=DEFAULT_BATCH_TILE):
    """PyTorch-layout wrapper: x [B, INPUT_SIZE] f32 -> [B, OUTPUT_SIZE] f32.

    The transpose/cast here is layout plumbing for API compatibility only; the
    feature-major path above avoids the extra HBM passes entirely.
    """
    x_fm = x.T.astype(jnp.bfloat16)                  # [INPUT_SIZE, B]
    out_fm = deep_q_net_forward_fm(x_fm, params, block_b=block_b)
    return out_fm.T


def init_params(key):
    """nn.Linear default init: U(-1/sqrt(fan_in), +1/sqrt(fan_in)) for weight & bias.
    Weights kept in PyTorch [out, in] layout (bf16); biases as [out, 1] f32 columns."""
    def linear(k, fan_in, fan_out):
        kw, kb = jax.random.split(k)
        bound = 1.0 / jnp.sqrt(float(fan_in))
        w = jax.random.uniform(kw, (fan_out, fan_in), jnp.float32, -bound, bound)
        b = jax.random.uniform(kb, (fan_out, 1), jnp.float32, -bound, bound)
        return w.astype(jnp.bfloat16), b

    k1, k2, k3 = jax.random.split(key, 3)
    w1, b1 = linear(k1, INPUT_SIZE, HIDDEN_SIZE)
    w2, b2 = linear(k2, HIDDEN_SIZE, HIDDEN_SIZE)
    w3, b3 = linear(k3, HIDDEN_SIZE, OUTPUT_SIZE)
    return (w1, b1, w2, b2, w3, b3)


def reference_forward(x, params):
    """Plain-JAX reference of DeepQNet.forward with the same bf16-in / f32-acc rounding."""
    w1, b1, w2, b2, w3, b3 = params
    f32 = jnp.float32
    xb = x.astype(jnp.bfloat16)
    h1 = jnp.maximum(jnp.dot(xb, w1.T, preferred_element_type=f32) + b1.T, 0.0)
    h2 = jnp.maximum(
        jnp.dot(h1.astype(jnp.bfloat16), w2.T, preferred_element_type=f32) + b2.T, 0.0)
    return jnp.dot(h2.astype(jnp.bfloat16), w3.T, preferred_element_type=f32) + b3.T


if __name__ == "__main__":
    key = jax.random.PRNGKey(0)
    k_params, k_x, k_x2 = jax.random.split(key, 3)

    params = init_params(k_params)

    # Small PyTorch-layout check (single grid step).
    batch = 8
    x = jax.random.normal(k_x, (batch, INPUT_SIZE), jnp.float32)
    out = jax.block_until_ready(deep_q_net_forward(x, params))
    ref = reference_forward(x, params)
    assert out.shape == (batch, OUTPUT_SIZE)
    assert jnp.allclose(out, ref, atol=2e-2, rtol=2e-2), float(jnp.max(jnp.abs(out - ref)))

    # Multi-step grid check via the feature-major fast path (exercises >=2 grid steps).
    batch2 = 512
    x2 = jax.random.normal(k_x2, (batch2, INPUT_SIZE), jnp.float32)
    out2_fm = jax.block_until_ready(
        deep_q_net_forward_fm(x2.T.astype(jnp.bfloat16), params))
    ref2 = reference_forward(x2, params)
    assert out2_fm.shape == (OUTPUT_SIZE, batch2)
    assert jnp.allclose(out2_fm.T, ref2, atol=2e-2, rtol=2e-2), \
        float(jnp.max(jnp.abs(out2_fm.T - ref2)))

    print("KERNEL_OK")
</pallas_src>

<mosaic_0001>
module attributes {stable_mosaic.version = 11 : i64} {
  func.func @_mlp_kernel(%arg0: i32, %arg1: memref<11x128xbf16, #tpu.memory_space<vmem>>, %arg2: memref<64x11xbf16, #tpu.memory_space<vmem>>, %arg3: memref<64x1xf32, #tpu.memory_space<vmem>>, %arg4: memref<64x64xbf16, #tpu.memory_space<vmem>>, %arg5: memref<64x1xf32, #tpu.memory_space<vmem>>, %arg6: memref<3x64xbf16, #tpu.memory_space<vmem>>, %arg7: memref<3x1xf32, #tpu.memory_space<vmem>>, %arg8: memref<3x128xf32, #tpu.memory_space<vmem>>) attributes {dimension_semantics = [#tpu.dimension_semantics<parallel>], iteration_bounds = array<i64: 1>, scalar_prefetch = 0 : i64, scratch_operands = 0 : i64, tpu.core_type = #tpu.core_type<tc>, window_params = [{transform_indices = @transform_0, window_bounds = array<i64: 11, 128>}, {pipeline_mode = #tpu.pipeline_mode<synchronous>, transform_indices = @transform_1, window_bounds = array<i64: 64, 11>}, {pipeline_mode = #tpu.pipeline_mode<synchronous>, transform_indices = @transform_2, window_bounds = array<i64: 64, 1>}, {pipeline_mode = #tpu.pipeline_mode<synchronous>, transform_indices = @transform_3, window_bounds = array<i64: 64, 64>}, {pipeline_mode = #tpu.pipeline_mode<synchronous>, transform_indices = @transform_4, window_bounds = array<i64: 64, 1>}, {pipeline_mode = #tpu.pipeline_mode<synchronous>, transform_indices = @transform_5, window_bounds = array<i64: 3, 64>}, {pipeline_mode = #tpu.pipeline_mode<synchronous>, transform_indices = @transform_6, window_bounds = array<i64: 3, 1>}, {transform_indices = @transform_7, window_bounds = array<i64: 3, 128>}]} {
    %c0 = arith.constant 0 : index
    %c0_0 = arith.constant 0 : index
    %0 = vector.load %arg1[%c0, %c0_0] : memref<11x128xbf16, #tpu.memory_space<vmem>>, vector<11x128xbf16>
    %c0_1 = arith.constant 0 : index
    %c0_2 = arith.constant 0 : index
    %1 = vector.load %arg2[%c0_1, %c0_2] : memref<64x11xbf16, #tpu.memory_space<vmem>>, vector<64x11xbf16>
    %cst = arith.constant dense<0.000000e+00> : vector<64x128xf32>
    %2 = tpu.matmul %1, %0, %cst {dimension_numbers = #tpu.dot_dimension_numbers<[1], [0], [0], [1], [0, 0, 1, 1], [], []>} : vector<64x11xbf16>, vector<11x128xbf16>, vector<64x128xf32> -> vector<64x128xf32>
    %c0_3 = arith.constant 0 : index
    %c0_4 = arith.constant 0 : index
    %3 = vector.load %arg3[%c0_3, %c0_4] : memref<64x1xf32, #tpu.memory_space<vmem>>, vector<64x1xf32>
    %4 = vector.broadcast %3 : vector<64x1xf32> to vector<64x128xf32>
    %5 = arith.addf %2, %4 : vector<64x128xf32>
    %cst_5 = arith.constant 0.000000e+00 : f32
    %6 = vector.broadcast %cst_5 : f32 to vector<64x128xf32>
    %7 = arith.maximumf %5, %6 : vector<64x128xf32>
    %8 = arith.truncf %7 : vector<64x128xf32> to vector<64x128xbf16>
    %c0_6 = arith.constant 0 : index
    %c0_7 = arith.constant 0 : index
    %9 = vector.load %arg4[%c0_6, %c0_7] : memref<64x64xbf16, #tpu.memory_space<vmem>>, vector<64x64xbf16>
    %cst_8 = arith.constant dense<0.000000e+00> : vector<64x128xf32>
    %10 = tpu.matmul %9, %8, %cst_8 {dimension_numbers = #tpu.dot_dimension_numbers<[1], [0], [0], [1], [0, 0, 1, 1], [], []>} : vector<64x64xbf16>, vector<64x128xbf16>, vector<64x128xf32> -> vector<64x128xf32>
    %c0_9 = arith.constant 0 : index
    %c0_10 = arith.constant 0 : index
    %11 = vector.load %arg5[%c0_9, %c0_10] : memref<64x1xf32, #tpu.memory_space<vmem>>, vector<64x1xf32>
    %12 = vector.broadcast %11 : vector<64x1xf32> to vector<64x128xf32>
    %13 = arith.addf %10, %12 : vector<64x128xf32>
    %cst_11 = arith.constant 0.000000e+00 : f32
    %14 = vector.broadcast %cst_11 : f32 to vector<64x128xf32>
    %15 = arith.maximumf %13, %14 : vector<64x128xf32>
    %16 = arith.truncf %15 : vector<64x128xf32> to vector<64x128xbf16>
    %c0_12 = arith.constant 0 : index
    %c0_13 = arith.constant 0 : index
    %17 = vector.load %arg6[%c0_12, %c0_13] : memref<3x64xbf16, #tpu.memory_space<vmem>>, vector<3x64xbf16>
    %cst_14 = arith.constant dense<0.000000e+00> : vector<3x128xf32>
    %18 = tpu.matmul %17, %16, %cst_14 {dimension_numbers = #tpu.dot_dimension_numbers<[1], [0], [0], [1], [0, 0, 1, 1], [], []>} : vector<3x64xbf16>, vector<64x128xbf16>, vector<3x128xf32> -> vector<3x128xf32>
    %c0_15 = arith.constant 0 : index
    %c0_16 = arith.constant 0 : index
    %19 = vector.load %arg7[%c0_15, %c0_16] : memref<3x1xf32, #tpu.memory_space<vmem>>, vector<3x1xf32>
    %20 = vector.broadcast %19 : vector<3x1xf32> to vector<3x128xf32>
    %21 = arith.addf %18, %20 : vector<3x128xf32>
    %c0_17 = arith.constant 0 : index
    %c0_18 = arith.constant 0 : index
    %22 = vector.load %arg8[%c0_17, %c0_18] : memref<3x128xf32, #tpu.memory_space<vmem>>, vector<3x128xf32>
    tpu.vector_store %arg8[%c0_17, %c0_18], %21 {strides = array<i32>} : memref<3x128xf32, #tpu.memory_space<vmem>>, vector<3x128xf32>,
    return
  }
  func.func @transform_0(%arg0: i32) -> (i32, i32) {
    %c0_i32 = arith.constant 0 : i32
    %c0_i32_0 = arith.constant 0 : i32
    return %c0_i32, %arg0 : i32, i32
  }
  func.func @transform_1(%arg0: i32) -> (i32, i32) {
    %c0_i32 = arith.constant 0 : i32
    %c0_i32_0 = arith.constant 0 : i32
    %c0_i32_1 = arith.constant 0 : i32
    return %c0_i32, %c0_i32_0 : i32, i32
  }
  func.func @transform_2(%arg0: i32) -> (i32, i32) {
    %c0_i32 = arith.constant 0 : i32
    %c0_i32_0 = arith.constant 0 : i32
    %c0_i32_1 = arith.constant 0 : i32
    return %c0_i32, %c0_i32_0 : i32, i32
  }
  func.func @transform_3(%arg0: i32) -> (i32, i32) {
    %c0_i32 = arith.constant 0 : i32
    %c0_i32_0 = arith.constant 0 : i32
    %c0_i32_1 = arith.constant 0 : i32
    return %c0_i32, %c0_i32_0 : i32, i32
  }
  func.func @transform_4(%arg0: i32) -> (i32, i32) {
    %c0_i32 = arith.constant 0 : i32
    %c0_i32_0 = arith.constant 0 : i32
    %c0_i32_1 = arith.constant 0 : i32
    return %c0_i32, %c0_i32_0 : i32, i32
  }
  func.func @transform_5(%arg0: i32) -> (i32, i32) {
    %c0_i32 = arith.constant 0 : i32
    %c0_i32_0 = arith.constant 0 : i32
    %c0_i32_1 = arith.constant 0 : i32
    return %c0_i32, %c0_i32_0 : i32, i32
  }
  func.func @transform_6(%arg0: i32) -> (i32, i32) {
    %c0_i32 = arith.constant 0 : i32
    %c0_i32_0 = arith.constant 0 : i32
    %c0_i32_1 = arith.constant 0 : i32
    return %c0_i32, %c0_i32_0 : i32, i32
  }
  func.func @transform_7(%arg0: i32) -> (i32, i32) {
    %c0_i32 = arith.constant 0 : i32
    %c0_i32_0 = arith.constant 0 : i32
    return %c0_i32, %arg0 : i32, i32
  }
}

</mosaic_0001>

<llo_original>
// kernel: deep_q_net_forward_fm.1
$region0: #{deep_q_net_forward_fm.1}
  #allocation0 [shape = 'u32[]', space=smem, size = 0x4, offset = 0x4, fixed_abs, tag = 'smem constant byte address 0x4 - core index']
  #allocation1 [shape = 'u32[144,128]{1,0:T(1,128)}', space=vmem, size = 0x12000, scoped, tag = 'internal scratch']
  %s0 = inlined_call_operand.vmem [shape: bf16[11,128], index: 0, kind: input, shape index: {}]
  %s1 = inlined_call_operand.vmem [shape: bf16[64,11], index: 1, kind: input, shape index: {}]
  %s2 = inlined_call_operand.vmem [shape: f32[64,1], index: 2, kind: input, shape index: {}]
  %s3 = inlined_call_operand.vmem [shape: bf16[64,64], index: 3, kind: input, shape index: {}]
  %s4 = inlined_call_operand.vmem [shape: f32[64,1], index: 4, kind: input, shape index: {}]
  %s5 = inlined_call_operand.vmem [shape: bf16[3,64], index: 5, kind: input, shape index: {}]
  %s6 = inlined_call_operand.vmem [shape: f32[3,1], index: 6, kind: input, shape index: {}]
  %s7 = inlined_call_operand.hbm [shape: f32[3,128], index: 7, kind: output, shape index: {}]
  %s8 = sld [smem:[#allocation0]]
  $region38: #{deep_q_net_forward_fm.1} parent=0
    _
  %s10 = ssub.s32 1, %s8
  %s11 = scalar_select 0, %s10, %s8
  $region1: #{deep_q_net_forward_fm.1} parent=0
    #allocation2 [shape = 'u8[2048]{0}', space=vmem, size = 0x800, scoped, tag = 'output window, operand 0, single buffered']
    #allocation3 [shape = 's32[1]{0}', space=sflag, size = 0x4, scoped, tag = 'scoped memory for deep_q_net_forward_fm.1']
    %12 = vsyncpa [#allocation3], 0
    // Predicated region
    $region2: #{deep_q_net_forward_fm.1} parent=1 // pred_check
      _
    $region3: #{deep_q_net_forward_fm.1} parent=1 // pred_check_branch
      %14 = sbr.rel (0) target = $region5
    $region4: #{deep_q_net_forward_fm.1} parent=1 // pred_region
      _
    $region5: #{deep_q_net_forward_fm.1} parent=1 // pred_fallthru
      _
    // Predicated region
    $region6: #{deep_q_net_forward_fm.1} parent=1 // pred_check
      _
    $region7: #{deep_q_net_forward_fm.1} parent=1 // pred_check_branch
      %16 = sbr.rel (0) target = $region9
    $region8: #{deep_q_net_forward_fm.1} parent=1 // pred_region
      _
    $region9: #{deep_q_net_forward_fm.1} parent=1 // pred_fallthru
      _
    // Predicated region
    $region10: #{deep_q_net_forward_fm.1} parent=1 // pred_check
      _
    $region11: #{deep_q_net_forward_fm.1} parent=1 // pred_check_branch
      %18 = sbr.rel (0) target = $region13
    $region12: #{deep_q_net_forward_fm.1} parent=1 // pred_region
      _
    $region13: #{deep_q_net_forward_fm.1} parent=1 // pred_fallthru
      _
    // Predicated region
    $region14: #{deep_q_net_forward_fm.1} parent=1 // pred_check
      _
    $region15: #{deep_q_net_forward_fm.1} parent=1 // pred_check_branch
      %20 = sbr.rel (0) target = $region17
    $region16: #{deep_q_net_forward_fm.1} parent=1 // pred_region
      _
    $region17: #{deep_q_net_forward_fm.1} parent=1 // pred_fallthru
      _
    // Predicated region
    $region18: #{deep_q_net_forward_fm.1} parent=1 // pred_check
      _
    $region19: #{deep_q_net_forward_fm.1} parent=1 // pred_check_branch
      %22 = sbr.rel (0) target = $region21
    $region20: #{deep_q_net_forward_fm.1} parent=1 // pred_region
      _
    $region21: #{deep_q_net_forward_fm.1} parent=1 // pred_fallthru
      _
    // Predicated region
    $region22: #{deep_q_net_forward_fm.1} parent=1 // pred_check
      _
    $region23: #{deep_q_net_forward_fm.1} parent=1 // pred_check_branch
      %24 = sbr.rel (0) target = $region25
    $region24: #{deep_q_net_forward_fm.1} parent=1 // pred_region
      _
    $region25: #{deep_q_net_forward_fm.1} parent=1 // pred_fallthru
      _
    // Predicated region
    $region26: #{deep_q_net_forward_fm.1} parent=1 // pred_check
      _
    $region27: #{deep_q_net_forward_fm.1} parent=1 // pred_check_branch
      %26 = sbr.rel (0) target = $region29
    $region28: #{deep_q_net_forward_fm.1} parent=1 // pred_region
      _
    $region29: #{deep_q_net_forward_fm.1} parent=1 // pred_fallthru
      _
    %v28 = vld [vmem:[%s0] sm:$0xf]
    %v29 = vld [vmem:[%s0 + $0x4] sm:$0x3]
    %v30 = vld [vmem:[%s1] sm:$0xf]
    %v31 = vld [vmem:[%s1 + $0x4] sm:$0xf]
    %v32 = vld [vmem:[%s1 + $0x8] sm:$0xf]
    %v33 = vld [vmem:[%s1 + $0xc] sm:$0xf]
    %v34 = vld [vmem:[%s1 + $0x10] sm:$0xf]
    %v35 = vld [vmem:[%s1 + $0x14] sm:$0xf]
    %v36 = vld [vmem:[%s1 + $0x18] sm:$0xf]
    %v37 = vld [vmem:[%s1 + $0x1c] sm:$0xf]
    %v38 = vld [vmem:[%s2] sm:$0xff]
    %v39 = vld [vmem:[%s2 + $0x8] sm:$0xff]
    %v40 = vld [vmem:[%s2 + $0x10] sm:$0xff]
    %v41 = vld [vmem:[%s2 + $0x18] sm:$0xff]
    %v42 = vld [vmem:[%s2 + $0x20] sm:$0xff]
    %v43 = vld [vmem:[%s2 + $0x28] sm:$0xff]
    %v44 = vld [vmem:[%s2 + $0x30] sm:$0xff]
    %v45 = vld [vmem:[%s2 + $0x38] sm:$0xff]
    %47 = vset.pattern.permute.xlu0 0
    %48 = vperm.xlu0 %47, %v38
    %v49 = vpop.permute.xlu0 %48
    %52 = vset.pattern.permute.xlu0 0
    %53 = vperm.xlu0 %52, %v39
    %v54 = vpop.permute.xlu0 %53
    %57 = vset.pattern.permute.xlu0 0
    %58 = vperm.xlu0 %57, %v40
    %v59 = vpop.permute.xlu0 %58
    %62 = vset.pattern.permute.xlu0 0
    %63 = vperm.xlu0 %62, %v41
    %v64 = vpop.permute.xlu0 %63
    %67 = vset.pattern.permute.xlu0 0
    %68 = vperm.xlu0 %67, %v42
    %v69 = vpop.permute.xlu0 %68
    %72 = vset.pattern.permute.xlu0 0
    %73 = vperm.xlu0 %72, %v43
    %v74 = vpop.permute.xlu0 %73
    %77 = vset.pattern.permute.xlu0 0
    %78 = vperm.xlu0 %77, %v44
    %v79 = vpop.permute.xlu0 %78
    %82 = vset.pattern.permute.xlu0 0
    %83 = vperm.xlu0 %82, %v45
    %v84 = vpop.permute.xlu0 %83
    %v94 = vunpack.c.l.b16 %v30
    %v95 = vunpack.c.l.b16 %v31
    %v96 = vunpack.c.l.b16 %v32
    %v97 = vunpack.c.l.b16 %v33
    %v98 = vunpack.c.l.b16 %v34
    %v99 = vunpack.c.l.b16 %v35
    %v100 = vunpack.c.l.b16 %v36
    %v101 = vunpack.c.l.b16 %v37
    %v102 = vpack.c.b16 %v95, %v94
    %v103 = vpack.c.b16 %v97, %v96
    %v104 = vpack.c.b16 %v99, %v98
    %v105 = vpack.c.b16 %v101, %v100
    %v108 = vunpack.c.l.b16 %v28
    %v109 = vunpack.c.l.b16 %v29
    %v110 = vpack.c.b16 %v109, %v108
    %vm111 = vcmask 89088
    %v113 = vsel %vm111, %v102, 0
    %v116 = vsel %vm111, %v103, 0
    %v119 = vsel %vm111, %v104, 0
    %v122 = vsel %vm111, %v105, 0
    %vm124 = vcmask 1044480
    %vm125 = vcmask 1045504
    %v126 = vsel %vm124, 4294967295, 65535
    %v127 = vsel %vm125, %v126, 0
    %v129 = vand.u32 %v110, %v127
    %131 = vmatprep.subr.bf16.mxu0 0
    %132 = vmatpush1.bf16.msra.mxu0 %v129
    %133 = vmatprep.subr.bf16.mxu0 0
    %134 = vmatpush1.bf16.msra.mxu0 0
    %135 = vmatprep.subr.bf16.mxu0 0
    %136 = vmatpush1.bf16.msra.mxu0 0
    %137 = vmatprep.subr.bf16.mxu0 0
    %138 = vmatpush1.bf16.msra.mxu0 0
    %139 = vmatprep.subr.bf16.mxu0 0
    %140 = vmatpush1.bf16.msra.mxu0 0
    %141 = vmatprep.subr.bf16.mxu0 0
    %142 = vmatpush1.bf16.msra.mxu0 0
    %143 = vmatprep.subr.bf16.mxu0 0
    %144 = vmatpush1.bf16.msra.mxu0 0
    %145 = vmatprep.subr.bf16.mxu0 0
    %146 = vmatpush1.bf16.msra.mxu0 0
    %147 = vmatprep.subr.bf16.mxu0 0
    %148 = vmatpush1.bf16.msra.mxu0 0
    %149 = vmatprep.subr.bf16.mxu0 0
    %150 = vmatpush1.bf16.msra.mxu0 0
    %151 = vmatprep.subr.bf16.mxu0 0
    %152 = vmatpush1.bf16.msra.mxu0 0
    %153 = vmatprep.subr.bf16.mxu0 0
    %154 = vmatpush1.bf16.msra.mxu0 0
    %155 = vmatprep.subr.bf16.mxu0 0
    %156 = vmatpush1.bf16.msra.mxu0 0
    %157 = vmatprep.subr.bf16.mxu0 0
    %158 = vmatpush1.bf16.msra.mxu0 0
    %159 = vmatprep.subr.bf16.mxu0 0
    %160 = vmatpush1.bf16.msra.mxu0 0
    %161 = vmatprep.subr.bf16.mxu0 0
    %162 = vmatpush1.bf16.msra.mxu0 0
    %163 = vmatprep.mubr.bf16.mxu0 0
    %164 = vmatmul.mubr.bf16.gmra.mrb[0].mxu0 %v113
    %v165 = vpop.f32.mrb[0].mxu0
    %v166 = vadd.f32 %v49, %v165
    %v167 = vpop.f32.mrb[0].mxu0
    %v168 = vpop.f32.mrb[0].mxu0
    %v169 = vadd.f32 %v54, %v168
    %v170 = vpop.f32.mrb[0].mxu0
    %171 = vmatprep.mubr.bf16.mxu0 0
    %172 = vmatmul.mubr.bf16.gmra.mrb[0].mxu0 %v116
    %v173 = vpop.f32.mrb[0].mxu0
    %v174 = vadd.f32 %v59, %v173
    %v175 = vpop.f32.mrb[0].mxu0
    %v176 = vpop.f32.mrb[0].mxu0
    %v177 = vadd.f32 %v64, %v176
    %v178 = vpop.f32.mrb[0].mxu0
    %179 = vmatprep.mubr.bf16.mxu0 0
    %180 = vmatmul.mubr.bf16.gmra.mrb[0].mxu0 %v119
    %v181 = vpop.f32.mrb[0].mxu0
    %v182 = vadd.f32 %v69, %v181
    %v183 = vpop.f32.mrb[0].mxu0
    %v184 = vpop.f32.mrb[0].mxu0
    %v185 = vadd.f32 %v74, %v184
    %v186 = vpop.f32.mrb[0].mxu0
    %187 = vmatprep.mubr.bf16.mxu0 0
    %188 = vmatmul.mubr.bf16.gmra.mrb[0].mxu0 %v122
    %v189 = vpop.f32.mrb[0].mxu0
    %v190 = vadd.f32 %v79, %v189
    %v191 = vpop.f32.mrb[0].mxu0
    %v192 = vpop.f32.mrb[0].mxu0
    %v193 = vadd.f32 %v84, %v192
    %v194 = vpop.f32.mrb[0].mxu0
    %195 = vdwg.mxu0
    %v196 = vmax.f32 %v166, 0.0
    %v197 = vmax.f32 %v169, 0.0
    %v198 = vmax.f32 %v174, 0.0
    %v199 = vmax.f32 %v177, 0.0
    %v200 = vmax.f32 %v182, 0.0
    %v201 = vmax.f32 %v185, 0.0
    %v202 = vmax.f32 %v190, 0.0
    %v203 = vmax.f32 %v193, 0.0
    %v204 = vpack.c.bf16 %v197, %v196
    %v205 = vpack.c.bf16 %v199, %v198
    %v206 = vpack.c.bf16 %v201, %v200
    %v207 = vpack.c.bf16 %v203, %v202
    %v208 = vld [vmem:[%s3] sm:$0xf]
    %v209 = vld [vmem:[%s3 + $0x4] sm:$0xf]
    %v210 = vld [vmem:[%s3 + $0x8] sm:$0xf]
    %v211 = vld [vmem:[%s3 + $0xc] sm:$0xf]
    %v212 = vld [vmem:[%s3 + $0x10] sm:$0xf]
    %v213 = vld [vmem:[%s3 + $0x14] sm:$0xf]
    %v214 = vld [vmem:[%s3 + $0x18] sm:$0xf]
    %v215 = vld [vmem:[%s3 + $0x1c] sm:$0xf]
    %v216 = vld [vmem:[%s4] sm:$0xff]
    %v217 = vld [vmem:[%s4 + $0x8] sm:$0xff]
    %v218 = vld [vmem:[%s4 + $0x10] sm:$0xff]
    %v219 = vld [vmem:[%s4 + $0x18] sm:$0xff]
    %v220 = vld [vmem:[%s4 + $0x20] sm:$0xff]
    %v221 = vld [vmem:[%s4 + $0x28] sm:$0xff]
    %v222 = vld [vmem:[%s4 + $0x30] sm:$0xff]
    %v223 = vld [vmem:[%s4 + $0x38] sm:$0xff]
    %225 = vset.pattern.permute.xlu0 0
    %226 = vperm.xlu0 %225, %v216
    %v227 = vpop.permute.xlu0 %226
    %230 = vset.pattern.permute.xlu0 0
    %231 = vperm.xlu0 %230, %v217
    %v232 = vpop.permute.xlu0 %231
    %235 = vset.pattern.permute.xlu0 0
    %236 = vperm.xlu0 %235, %v218
    %v237 = vpop.permute.xlu0 %236
    %240 = vset.pattern.permute.xlu0 0
    %241 = vperm.xlu0 %240, %v219
    %v242 = vpop.permute.xlu0 %241
    %245 = vset.pattern.permute.xlu0 0
    %246 = vperm.xlu0 %245, %v220
    %v247 = vpop.permute.xlu0 %246
    %250 = vset.pattern.permute.xlu0 0
    %251 = vperm.xlu0 %250, %v221
    %v252 = vpop.permute.xlu0 %251
    %255 = vset.pattern.permute.xlu0 0
    %256 = vperm.xlu0 %255, %v222
    %v257 = vpop.permute.xlu0 %256
    %260 = vset.pattern.permute.xlu0 0
    %261 = vperm.xlu0 %260, %v223
    %v262 = vpop.permute.xlu0 %261
    %v272 = vunpack.c.l.b16 %v208
    %v273 = vunpack.c.l.b16 %v209
    %v274 = vunpack.c.l.b16 %v210
    %v275 = vunpack.c.l.b16 %v211
    %v276 = vunpack.c.l.b16 %v212
    %v277 = vunpack.c.l.b16 %v213
    %v278 = vunpack.c.l.b16 %v214
    %v279 = vunpack.c.l.b16 %v215
    %v280 = vpack.c.b16 %v273, %v272
    %v281 = vpack.c.b16 %v275, %v274
    %v282 = vpack.c.b16 %v277, %v276
    %v283 = vpack.c.b16 %v279, %v278
    %vm284 = vcmask 523264
    %v286 = vsel %vm284, %v280, 0
    %v289 = vsel %vm284, %v281, 0
    %v292 = vsel %vm284, %v282, 0
    %v295 = vsel %vm284, %v283, 0
    %297 = vmatprep.subr.bf16.mxu0 0
    %298 = vmatpush1.bf16.msra.mxu0 %v204
    %299 = vmatprep.subr.bf16.mxu0 0
    %300 = vmatpush1.bf16.msra.mxu0 %v205
    %301 = vmatprep.subr.bf16.mxu0 0
    %302 = vmatpush1.bf16.msra.mxu0 %v206
    %303 = vmatprep.subr.bf16.mxu0 0
    %304 = vmatpush1.bf16.msra.mxu0 %v207
    %305 = vmatprep.subr.bf16.mxu0 0
    %306 = vmatpush1.bf16.msra.mxu0 0
    %307 = vmatprep.subr.bf16.mxu0 0
    %308 = vmatpush1.bf16.msra.mxu0 0
    %309 = vmatprep.subr.bf16.mxu0 0
    %310 = vmatpush1.bf16.msra.mxu0 0
    %311 = vmatprep.subr.bf16.mxu0 0
    %312 = vmatpush1.bf16.msra.mxu0 0
    %313 = vmatprep.subr.bf16.mxu0 0
    %314 = vmatpush1.bf16.msra.mxu0 0
    %315 = vmatprep.subr.bf16.mxu0 0
    %316 = vmatpush1.bf16.msra.mxu0 0
    %317 = vmatprep.subr.bf16.mxu0 0
    %318 = vmatpush1.bf16.msra.mxu0 0
    %319 = vmatprep.subr.bf16.mxu0 0
    %320 = vmatpush1.bf16.msra.mxu0 0
    %321 = vmatprep.subr.bf16.mxu0 0
    %322 = vmatpush1.bf16.msra.mxu0 0
    %323 = vmatprep.subr.bf16.mxu0 0
    %324 = vmatpush1.bf16.msra.mxu0 0
    %325 = vmatprep.subr.bf16.mxu0 0
    %326 = vmatpush1.bf16.msra.mxu0 0
    %327 = vmatprep.subr.bf16.mxu0 0
    %328 = vmatpush1.bf16.msra.mxu0 0
    %329 = vmatprep.mubr.bf16.mxu0 0
    %330 = vmatmul.mubr.bf16.gmra.mrb[0].mxu0 %v286
    %v331 = vpop.f32.mrb[0].mxu0
    %v332 = vadd.f32 %v227, %v331
    %v333 = vpop.f32.mrb[0].mxu0
    %v334 = vpop.f32.mrb[0].mxu0
    %v335 = vadd.f32 %v232, %v334
    %v336 = vpop.f32.mrb[0].mxu0
    %337 = vmatprep.mubr.bf16.mxu0 0
    %338 = vmatmul.mubr.bf16.gmra.mrb[0].mxu0 %v289
    %v339 = vpop.f32.mrb[0].mxu0
    %v340 = vadd.f32 %v237, %v339
    %v341 = vpop.f32.mrb[0].mxu0
    %v342 = vpop.f32.mrb[0].mxu0
    %v343 = vadd.f32 %v242, %v342
    %v344 = vpop.f32.mrb[0].mxu0
    %345 = vmatprep.mubr.bf16.mxu0 0
    %346 = vmatmul.mubr.bf16.gmra.mrb[0].mxu0 %v292
    %v347 = vpop.f32.mrb[0].mxu0
    %v348 = vadd.f32 %v247, %v347
    %v349 = vpop.f32.mrb[0].mxu0
    %v350 = vpop.f32.mrb[0].mxu0
    %v351 = vadd.f32 %v252, %v350
    %v352 = vpop.f32.mrb[0].mxu0
    %353 = vmatprep.mubr.bf16.mxu0 0
    %354 = vmatmul.mubr.bf16.gmra.mrb[0].mxu0 %v295
    %v355 = vpop.f32.mrb[0].mxu0
    %v356 = vadd.f32 %v257, %v355
    %v357 = vpop.f32.mrb[0].mxu0
    %v358 = vpop.f32.mrb[0].mxu0
    %v359 = vadd.f32 %v262, %v358
    %v360 = vpop.f32.mrb[0].mxu0
    %361 = vdwg.mxu0
    %v362 = vmax.f32 %v332, 0.0
    %v363 = vmax.f32 %v335, 0.0
    %v364 = vmax.f32 %v340, 0.0
    %v365 = vmax.f32 %v343, 0.0
    %v366 = vmax.f32 %v348, 0.0
    %v367 = vmax.f32 %v351, 0.0
    %v368 = vmax.f32 %v356, 0.0
    %v369 = vmax.f32 %v359, 0.0
    %v370 = vpack.c.bf16 %v363, %v362
    %v371 = vpack.c.bf16 %v365, %v364
    %v372 = vpack.c.bf16 %v367, %v366
    %v373 = vpack.c.bf16 %v369, %v368
    %v374 = vld [vmem:[%s5] sm:$0x3]
    %v375 = vld [vmem:[%s6] sm:$0x7]
    %377 = vset.pattern.permute.xlu0 0
    %378 = vperm.xlu0 %377, %v375
    %v379 = vpop.permute.xlu0 %378
    %v382 = vsel %vm284, %v374, 0
    %384 = vmatprep.subr.bf16.mxu0 0
    %385 = vmatpush1.bf16.msra.mxu0 %v370
    %386 = vmatprep.subr.bf16.mxu0 0
    %387 = vmatpush1.bf16.msra.mxu0 %v371
    %388 = vmatprep.subr.bf16.mxu0 0
    %389 = vmatpush1.bf16.msra.mxu0 %v372
    %390 = vmatprep.subr.bf16.mxu0 0
    %391 = vmatpush1.bf16.msra.mxu0 %v373
    %392 = vmatprep.subr.bf16.mxu0 0
    %393 = vmatpush1.bf16.msra.mxu0 0
    %394 = vmatprep.subr.bf16.mxu0 0
    %395 = vmatpush1.bf16.msra.mxu0 0
    %396 = vmatprep.subr.bf16.mxu0 0
    %397 = vmatpush1.bf16.msra.mxu0 0
    %398 = vmatprep.subr.bf16.mxu0 0
    %399 = vmatpush1.bf16.msra.mxu0 0
    %400 = vmatprep.subr.bf16.mxu0 0
    %401 = vmatpush1.bf16.msra.mxu0 0
    %402 = vmatprep.subr.bf16.mxu0 0
    %403 = vmatpush1.bf16.msra.mxu0 0
    %404 = vmatprep.subr.bf16.mxu0 0
    %405 = vmatpush1.bf16.msra.mxu0 0
    %406 = vmatprep.subr.bf16.mxu0 0
    %407 = vmatpush1.bf16.msra.mxu0 0
    %408 = vmatprep.subr.bf16.mxu0 0
    %409 = vmatpush1.bf16.msra.mxu0 0
    %410 = vmatprep.subr.bf16.mxu0 0
    %411 = vmatpush1.bf16.msra.mxu0 0
    %412 = vmatprep.subr.bf16.mxu0 0
    %413 = vmatpush1.bf16.msra.mxu0 0
    %414 = vmatprep.subr.bf16.mxu0 0
    %415 = vmatpush1.bf16.msra.mxu0 0
    %416 = vmatprep.mubr.bf16.mxu0 0
    %417 = vmatmul.mubr.bf16.gmra.mrb[0].mxu0 %v382
    %v418 = vpop.f32.mrb[0].mxu0
    %v419 = vadd.f32 %v379, %v418
    %v420 = vpop.f32.mrb[0].mxu0
    %v421 = vpop.f32.mrb[0].mxu0
    %v422 = vpop.f32.mrb[0].mxu0
    %423 = vdwg.mxu0
    %424 = vst [vmem:[#allocation2] sm:$0x7] %v419
    // Predicated region
    $region30: #{deep_q_net_forward_fm.1} parent=1 // pred_check
      _
    $region31: #{deep_q_net_forward_fm.1} parent=1 // pred_check_branch
      %426 = sbr.rel (0) target = $region33
    $region32: #{deep_q_net_forward_fm.1} parent=1 // pred_region
      %s428 = ssub.s32 64, 64
      %429 = vsyncadd [#allocation3], %s428
      %s431 = sshll.u32 [#allocation2], 4
      %s432 = int_to_ptr.vmem [resolvable:$true] %s431
      %434 = dma.vmem_to_hbm [thread:$0]  %s432, 64, %s7, [#allocation3]
    $region33: #{deep_q_net_forward_fm.1} parent=1 // pred_fallthru
      _
    // Predicated region
    $region34: #{deep_q_net_forward_fm.1} parent=1 // pred_check
      _
    $region35: #{deep_q_net_forward_fm.1} parent=1 // pred_check_branch
      %436 = sbr.rel (0) target = $region37
    $region36: #{deep_q_net_forward_fm.1} parent=1 // pred_region
      %437 = dma.done [#allocation3], 64
    $region37: #{deep_q_net_forward_fm.1} parent=1 // pred_fallthru
      _
    %438 = vsyncpa [#allocation3], 1

</llo_original>
